<compile_context>
chip_gen: v7x
topology: tpu7x:2x2x1
jax: 0.10.0
libtpu: 0.0.40
codegen_flags: <defaults>
</compile_context>

<pallas_src>
import functools

import jax
import jax.numpy as jnp
from jax import lax
from jax.experimental import pallas as pl
from jax.experimental.pallas import tpu as pltpu

UNCERTAIN = -1.0
MISSING = -2.0

_LANES = 128


def _cdiv(a, b):
    return -(-a // b)


def _round_up(x, m):
    return -(-x // m) * m


def _rowgroup_sum(a):
    """(tile_rows, C) f32 -> (8, C) by summing aligned 8-row sublane groups.

    Static 8-aligned slices are free views of the (8,128) tile layout, so this
    is pure VALU vreg adds (no XLU traffic, no reshape lowering).
    """
    acc = a[0:8, :]
    for r in range(8, a.shape[0], 8):
        acc = acc + a[r:r + 8, :]
    return acc


def _masked_loss_kernel(x_ref, y_ref, out_ref, loss_acc, mask_acc, *,
                        rows_total, steps, tile_rows):
    c = pl.program_id(0)
    i = pl.program_id(1)

    @pl.when(i == 0)
    def _():
        loss_acc[...] = jnp.zeros_like(loss_acc)
        mask_acc[...] = jnp.zeros_like(mask_acc)

    # Native-dtype DMA (bf16 logits / int8 targets supported); cast to f32 in
    # registers only.
    x = x_ref[...].astype(jnp.float32)
    y = y_ref[...].astype(jnp.float32)

    # Rows at/after rows_total are edge-block padding (or a clamped duplicate
    # block on the second TensorCore) -> masked out.  Real labels are >= 0;
    # uncertain (-1) and missing (-2) are masked.
    row_start = (c * steps + i) * tile_rows
    local_row = lax.broadcasted_iota(jnp.int32, x.shape, 0)
    valid = ((row_start + local_row) < rows_total) & (y >= 0.0)

    # BCEWithLogitsLoss(reduction='none'), numerically stable form:
    #   max(x, 0) - x*y + log(1 + exp(-|x|))
    loss = jnp.maximum(x, 0.0) - x * y + jnp.log1p(jnp.exp(-jnp.abs(x)))

    # where-select (not cast+multiply): fewer VALU ops and keeps Inf/NaN from
    # padded garbage lanes out of the sums (Inf * 0 would be NaN).
    loss_blk = jnp.where(valid, loss, 0.0)
    mask_blk = jnp.where(valid, 1.0, 0.0)

    # Fold the (tile_rows, C) block to one (8, C) row-group per step so the
    # VMEM accumulators stay tiny.
    loss_acc[...] += _rowgroup_sum(loss_blk)
    mask_acc[...] += _rowgroup_sum(mask_blk)

    @pl.when(i == pl.num_programs(1) - 1)
    def _():
        out_ref[0, 0] = jnp.sum(loss_acc[...])
        out_ref[0, 1] = jnp.sum(mask_acc[...])


@functools.partial(jax.jit, static_argnames=("ncores", "core_parallel"))
def _masked_loss_sums(logits, targets, *, ncores, core_parallel):
    """Returns (ncores, 2) partial [masked-loss-sum, mask-sum] rows."""
    n = logits.size

    # Copy-free layout choice (reshapes of contiguous arrays are free under
    # jit): lane-dense (n/128, 128) slab when possible, otherwise the original
    # 2-D (rows, cols) view.  No jnp.pad / astype passes over HBM.
    if n % _LANES == 0:
        x2 = logits.reshape(n // _LANES, _LANES)
        y2 = targets.reshape(n // _LANES, _LANES)
    else:
        lead = logits.shape[0] if logits.ndim > 1 else 1
        x2 = logits.reshape(lead, n // lead)
        y2 = targets.reshape(lead, n // lead)

    rows, cols = x2.shape
    cols_padded = _round_up(cols, _LANES)

    # Big row tiles amortize the ~0.35us/grid-step overhead; keep blocks at
    # <=~4 MiB and rows a multiple of 32 (int8 min tile second-minor).
    tr = min(1024, max(32, ((4 << 20) // (cols_padded * 4)) // 32 * 32))
    tr = min(tr, _round_up(rows, 32))

    total_blocks = _cdiv(rows, tr)
    steps = _cdiv(total_blocks, ncores)

    def in_map(c, i):
        # Clamp so the DMA never walks past the array; the kernel masks the
        # duplicated / padded rows by global row index.
        return (jnp.minimum(c * steps + i, total_blocks - 1), 0)

    kernel = functools.partial(
        _masked_loss_kernel, rows_total=rows, steps=steps, tile_rows=tr)

    bytes_in = int(x2.size * x2.dtype.itemsize + y2.size * y2.dtype.itemsize)
    cost = pl.CostEstimate(
        flops=10 * rows * cols,
        transcendentals=2 * rows * cols,
        bytes_accessed=bytes_in + ncores * 2 * 4,
    )

    # 2 inputs x 2 pipeline buffers (worst-case f32 VMEM footprint) + headroom;
    # well inside the scoped VMEM of every TPU generation.
    block_bytes = tr * cols_padded * 4
    vmem_limit = int(min(64 << 20, max(4 << 20, 4 * block_bytes + (1 << 20))))

    dims = (pltpu.CORE_PARALLEL if core_parallel else pltpu.ARBITRARY,
            pltpu.ARBITRARY)

    return pl.pallas_call(
        kernel,
        out_shape=jax.ShapeDtypeStruct((ncores, 2), jnp.float32),
        grid_spec=pltpu.PrefetchScalarGridSpec(
            num_scalar_prefetch=0,
            grid=(ncores, steps),
            in_specs=[
                pl.BlockSpec((tr, cols), in_map),
                pl.BlockSpec((tr, cols), in_map),
            ],
            out_specs=pl.BlockSpec((1, 2), lambda c, i: (c, 0),
                                   memory_space=pltpu.SMEM),
            scratch_shapes=[
                pltpu.VMEM((8, cols), jnp.float32),  # masked-loss partials
                pltpu.VMEM((8, cols), jnp.float32),  # mask partials
            ],
        ),
        compiler_params=pltpu.CompilerParams(
            dimension_semantics=dims,
            vmem_limit_bytes=vmem_limit,
        ),
        cost_estimate=cost,
    )(x2, y2)


def _tensorcores_per_chip():
    # v7x exposes 2 TensorCores per chip; v5e/v6e have 1.
    try:
        kind = jax.devices()[0].device_kind.lower()
    except Exception:
        return 1
    return 2 if "7" in kind else 1


def masked_bce_loss(logits, targets):
    """loss.sum() / mask.sum() with uncertain (-1) / missing (-2) masked.

    Matches MaskedLossWrapper(BCEWithLogitsLoss(reduction='none'),
    mask_uncertain=True, has_missing_tasks=True).  Returns Inf/NaN if every
    label is masked (same as the reference module).
    """
    if _tensorcores_per_chip() > 1:
        try:
            partials = _masked_loss_sums(logits, targets, ncores=2,
                                         core_parallel=True)
            partials = jax.block_until_ready(partials)
        except Exception:
            # TODO(synk): if the 2-TensorCore CORE_PARALLEL split fails to
            # lower on this toolchain, fall back to the single-core kernel.
            partials = _masked_loss_sums(logits, targets, ncores=1,
                                         core_parallel=False)
    else:
        partials = _masked_loss_sums(logits, targets, ncores=1,
                                     core_parallel=False)
    loss_sum = jnp.sum(partials[:, 0])
    mask_sum = jnp.sum(partials[:, 1])
    return loss_sum / mask_sum


def _reference(logits, targets):
    x = logits.astype(jnp.float32)
    y = targets.astype(jnp.float32)
    loss = jnp.maximum(x, 0.0) - x * y + jnp.log1p(jnp.exp(-jnp.abs(x)))
    mask = jnp.where((y == UNCERTAIN) | (y == MISSING), 0.0, 1.0)
    return jnp.sum(loss * mask) / jnp.sum(mask)


if __name__ == "__main__":
    key = jax.random.PRNGKey(0)
    k1, k2, k3, k4 = jax.random.split(key, 4)

    # Small shapes consistent with the module: batch=16, tasks=16.
    B, T = 16, 16
    logits = jax.random.normal(k1, (B, T), dtype=jnp.float32)
    # Labels drawn from {-2 (missing), -1 (uncertain), 0 (neg), 1 (pos)}.
    targets = jax.random.randint(k2, (B, T), minval=-2, maxval=2).astype(
        jnp.float32
    )
    out = jax.block_until_ready(masked_bce_loss(logits, targets))
    ref = _reference(logits, targets)
    assert jnp.allclose(out, ref, rtol=1e-5, atol=1e-5), (out, ref)

    # Native-dtype / ragged path: bf16 logits + int8 targets, minor dim not a
    # multiple of 128 (exercises in-kernel edge masking, no wrapper pads).
    B2, T2 = 6, 50
    logits2 = jax.random.normal(k3, (B2, T2), dtype=jnp.float32).astype(
        jnp.bfloat16
    )
    targets2 = jax.random.randint(k4, (B2, T2), minval=-2, maxval=2).astype(
        jnp.int8
    )
    out2 = jax.block_until_ready(masked_bce_loss(logits2, targets2))
    ref2 = _reference(logits2, targets2)
    assert jnp.allclose(out2, ref2, rtol=1e-3, atol=1e-3), (out2, ref2)

    print("KERNEL_OK")
</pallas_src>

<mosaic_0001>
module attributes {stable_mosaic.version = 11 : i64} {
  func.func @_masked_loss_kernel(%arg0: i32, %arg1: i32, %arg2: memref<32x128xf32, #tpu.memory_space<vmem>>, %arg3: memref<32x128xf32, #tpu.memory_space<vmem>>, %arg4: memref<1x2xf32, #tpu.memory_space<smem>>, %arg5: memref<8x128xf32, #tpu.memory_space<vmem>>, %arg6: memref<8x128xf32, #tpu.memory_space<vmem>>) attributes {dimension_semantics = [#tpu.dimension_semantics<arbitrary>, #tpu.dimension_semantics<arbitrary>], iteration_bounds = array<i64: 1, 1>, scalar_prefetch = 0 : i64, scratch_operands = 2 : i64, tpu.core_type = #tpu.core_type<tc>, window_params = [{transform_indices = @transform_0, window_bounds = array<i64: 32, 128>}, {transform_indices = @transform_1, window_bounds = array<i64: 32, 128>}, {transform_indices = @transform_2, window_bounds = array<i64: 1, 2>}]} {
    %c0_i32 = arith.constant 0 : i32
    %0 = arith.cmpi eq, %arg1, %c0_i32 : i32
    %1 = arith.extui %0 : i1 to i32
    %c0_i32_0 = arith.constant 0 : i32
    %2 = arith.cmpi ne, %1, %c0_i32_0 : i32
    scf.if %2 {
      %cst_19 = arith.constant 0.000000e+00 : f32
      %54 = vector.broadcast %cst_19 : f32 to vector<8x128xf32>
      %c0_20 = arith.constant 0 : index
      %c0_21 = arith.constant 0 : index
      %55 = vector.load %arg5[%c0_20, %c0_21] : memref<8x128xf32, #tpu.memory_space<vmem>>, vector<8x128xf32>
      tpu.vector_store %arg5[%c0_20, %c0_21], %54 {strides = array<i32>} : memref<8x128xf32, #tpu.memory_space<vmem>>, vector<8x128xf32>,
      %cst_22 = arith.constant 0.000000e+00 : f32
      %56 = vector.broadcast %cst_22 : f32 to vector<8x128xf32>
      %c0_23 = arith.constant 0 : index
      %c0_24 = arith.constant 0 : index
      %57 = vector.load %arg6[%c0_23, %c0_24] : memref<8x128xf32, #tpu.memory_space<vmem>>, vector<8x128xf32>
      tpu.vector_store %arg6[%c0_23, %c0_24], %56 {strides = array<i32>} : memref<8x128xf32, #tpu.memory_space<vmem>>, vector<8x128xf32>,
    } else {
    }
    %c0 = arith.constant 0 : index
    %c0_1 = arith.constant 0 : index
    %3 = vector.load %arg2[%c0, %c0_1] : memref<32x128xf32, #tpu.memory_space<vmem>>, vector<32x128xf32>
    %c0_2 = arith.constant 0 : index
    %c0_3 = arith.constant 0 : index
    %4 = vector.load %arg3[%c0_2, %c0_3] : memref<32x128xf32, #tpu.memory_space<vmem>>, vector<32x128xf32>
    %c1_i32 = arith.constant 1 : i32
    %5 = arith.muli %arg0, %c1_i32 : i32
    %6 = arith.addi %5, %arg1 : i32
    %c32_i32 = arith.constant 32 : i32
    %7 = arith.muli %6, %c32_i32 : i32
    %8 = tpu.iota {dimensions = array<i32: 0>} : vector<32x128xi32>
    %9 = vector.broadcast %7 : i32 to vector<32x128xi32>
    %10 = arith.addi %9, %8 : vector<32x128xi32>
    %c2_i32 = arith.constant 2 : i32
    %11 = vector.broadcast %c2_i32 : i32 to vector<32x128xi32>
    %12 = arith.cmpi slt, %10, %11 : vector<32x128xi32>
    %cst = arith.constant 0.000000e+00 : f32
    %13 = vector.broadcast %cst : f32 to vector<32x128xf32>
    %14 = arith.cmpf oge, %4, %13 : vector<32x128xf32>
    %15 = arith.andi %12, %14 : vector<32x128xi1>
    %cst_4 = arith.constant 0.000000e+00 : f32
    %16 = vector.broadcast %cst_4 : f32 to vector<32x128xf32>
    %17 = arith.maximumf %3, %16 : vector<32x128xf32>
    %18 = arith.mulf %3, %4 : vector<32x128xf32>
    %19 = arith.subf %17, %18 : vector<32x128xf32>
    %20 = math.absf %3 : vector<32x128xf32>
    %cst_5 = arith.constant 0.000000e+00 : f32
    %21 = vector.broadcast %cst_5 : f32 to vector<32x128xf32>
    %22 = arith.subf %21, %20 : vector<32x128xf32>
    %23 = math.exp %22 : vector<32x128xf32>
    %24 = math.log1p %23 : vector<32x128xf32>
    %25 = arith.addf %19, %24 : vector<32x128xf32>
    %cst_6 = arith.constant 0.000000e+00 : f32
    %26 = vector.broadcast %cst_6 : f32 to vector<32x128xf32>
    %27 = arith.select %15, %25, %26 : vector<32x128xi1>, vector<32x128xf32>
    %cst_7 = arith.constant 1.000000e+00 : f32
    %cst_8 = arith.constant 0.000000e+00 : f32
    %28 = vector.broadcast %cst_7 : f32 to vector<32x128xf32>
    %29 = vector.broadcast %cst_8 : f32 to vector<32x128xf32>
    %30 = arith.select %15, %28, %29 : vector<32x128xi1>, vector<32x128xf32>
    %c0_9 = arith.constant 0 : index
    %c0_10 = arith.constant 0 : index
    %31 = vector.load %arg5[%c0_9, %c0_10] : memref<8x128xf32, #tpu.memory_space<vmem>>, vector<8x128xf32>
    %32 = vector.extract_strided_slice %27 {offsets = [0, 0], sizes = [8, 128], strides = [1, 1]} : vector<32x128xf32> to vector<8x128xf32>
    %33 = vector.extract_strided_slice %27 {offsets = [8, 0], sizes = [8, 128], strides = [1, 1]} : vector<32x128xf32> to vector<8x128xf32>
    %34 = arith.addf %32, %33 : vector<8x128xf32>
    %35 = vector.extract_strided_slice %27 {offsets = [16, 0], sizes = [8, 128], strides = [1, 1]} : vector<32x128xf32> to vector<8x128xf32>
    %36 = arith.addf %34, %35 : vector<8x128xf32>
    %37 = vector.extract_strided_slice %27 {offsets = [24, 0], sizes = [8, 128], strides = [1, 1]} : vector<32x128xf32> to vector<8x128xf32>
    %38 = arith.addf %36, %37 : vector<8x128xf32>
    %39 = arith.addf %31, %38 : vector<8x128xf32>
    %c0_11 = arith.constant 0 : index
    %c0_12 = arith.constant 0 : index
    %40 = vector.load %arg5[%c0_11, %c0_12] : memref<8x128xf32, #tpu.memory_space<vmem>>, vector<8x128xf32>
    tpu.vector_store %arg5[%c0_11, %c0_12], %39 {strides = array<i32>} : memref<8x128xf32, #tpu.memory_space<vmem>>, vector<8x128xf32>,
    %c0_13 = arith.constant 0 : index
    %c0_14 = arith.constant 0 : index
    %41 = vector.load %arg6[%c0_13, %c0_14] : memref<8x128xf32, #tpu.memory_space<vmem>>, vector<8x128xf32>
    %42 = vector.extract_strided_slice %30 {offsets = [0, 0], sizes = [8, 128], strides = [1, 1]} : vector<32x128xf32> to vector<8x128xf32>
    %43 = vector.extract_strided_slice %30 {offsets = [8, 0], sizes = [8, 128], strides = [1, 1]} : vector<32x128xf32> to vector<8x128xf32>
    %44 = arith.addf %42, %43 : vector<8x128xf32>
    %45 = vector.extract_strided_slice %30 {offsets = [16, 0], sizes = [8, 128], strides = [1, 1]} : vector<32x128xf32> to vector<8x128xf32>
    %46 = arith.addf %44, %45 : vector<8x128xf32>
    %47 = vector.extract_strided_slice %30 {offsets = [24, 0], sizes = [8, 128], strides = [1, 1]} : vector<32x128xf32> to vector<8x128xf32>
    %48 = arith.addf %46, %47 : vector<8x128xf32>
    %49 = arith.addf %41, %48 : vector<8x128xf32>
    %c0_15 = arith.constant 0 : index
    %c0_16 = arith.constant 0 : index
    %50 = vector.load %arg6[%c0_15, %c0_16] : memref<8x128xf32, #tpu.memory_space<vmem>>, vector<8x128xf32>
    tpu.vector_store %arg6[%c0_15, %c0_16], %49 {strides = array<i32>} : memref<8x128xf32, #tpu.memory_space<vmem>>, vector<8x128xf32>,
    %c0_i32_17 = arith.constant 0 : i32
    %51 = arith.cmpi eq, %arg1, %c0_i32_17 : i32
    %52 = arith.extui %51 : i1 to i32
    %c0_i32_18 = arith.constant 0 : i32
    %53 = arith.cmpi ne, %52, %c0_i32_18 : i32
    scf.if %53 {
      %c0_19 = arith.constant 0 : index
      %c0_20 = arith.constant 0 : index
      %54 = vector.load %arg5[%c0_19, %c0_20] : memref<8x128xf32, #tpu.memory_space<vmem>>, vector<8x128xf32>
      %55 = vector.shape_cast %54 : vector<8x128xf32> to vector<1x8x128xf32>
      %cst_21 = arith.constant dense<0.000000e+00> : vector<1xf32>
      %56 = vector.multi_reduction <add>, %55, %cst_21 [1, 2] : vector<1x8x128xf32> to vector<1xf32>
      %57 = vector.shape_cast %56 : vector<1xf32> to vector<1x1x1xf32>
      %58 = vector.extract %57[0, 0, 0] : f32 from vector<1x1x1xf32>
      %c0_22 = arith.constant 0 : index
      %c0_23 = arith.constant 0 : index
      %59 = memref.load %arg4[%c0_22, %c0_23] : memref<1x2xf32, #tpu.memory_space<smem>>
      memref.store %58, %arg4[%c0_22, %c0_23] : memref<1x2xf32, #tpu.memory_space<smem>>
      %c0_24 = arith.constant 0 : index
      %c0_25 = arith.constant 0 : index
      %60 = vector.load %arg6[%c0_24, %c0_25] : memref<8x128xf32, #tpu.memory_space<vmem>>, vector<8x128xf32>
      %61 = vector.shape_cast %60 : vector<8x128xf32> to vector<1x8x128xf32>
      %cst_26 = arith.constant dense<0.000000e+00> : vector<1xf32>
      %62 = vector.multi_reduction <add>, %61, %cst_26 [1, 2] : vector<1x8x128xf32> to vector<1xf32>
      %63 = vector.shape_cast %62 : vector<1xf32> to vector<1x1x1xf32>
      %64 = vector.extract %63[0, 0, 0] : f32 from vector<1x1x1xf32>
      %c0_27 = arith.constant 0 : index
      %c1 = arith.constant 1 : index
      %65 = memref.load %arg4[%c0_27, %c1] : memref<1x2xf32, #tpu.memory_space<smem>>
      memref.store %64, %arg4[%c0_27, %c1] : memref<1x2xf32, #tpu.memory_space<smem>>
    } else {
    }
    return
  }
  func.func @transform_0(%arg0: i32, %arg1: i32) -> (i32, i32) {
    %c1_i32 = arith.constant 1 : i32
    %0 = arith.muli %arg0, %c1_i32 : i32
    %1 = arith.addi %0, %arg1 : i32
    %c0_i32 = arith.constant 0 : i32
    %2 = arith.minsi %1, %c0_i32 : i32
    %c0_i32_0 = arith.constant 0 : i32
    %c0_i32_1 = arith.constant 0 : i32
    return %2, %c0_i32_0 : i32, i32
  }
  func.func @transform_1(%arg0: i32, %arg1: i32) -> (i32, i32) {
    %c1_i32 = arith.constant 1 : i32
    %0 = arith.muli %arg0, %c1_i32 : i32
    %1 = arith.addi %0, %arg1 : i32
    %c0_i32 = arith.constant 0 : i32
    %2 = arith.minsi %1, %c0_i32 : i32
    %c0_i32_0 = arith.constant 0 : i32
    %c0_i32_1 = arith.constant 0 : i32
    return %2, %c0_i32_0 : i32, i32
  }
  func.func @transform_2(%arg0: i32, %arg1: i32) -> (i32, i32) {
    %c0_i32 = arith.constant 0 : i32
    %c0_i32_0 = arith.constant 0 : i32
    return %arg0, %c0_i32 : i32, i32
  }
}

</mosaic_0001>

<llo_original>
// kernel: _masked_loss_sums.1
$region0: #{_masked_loss_sums.1}
  #allocation0 [shape = 'u32[]', space=smem, size = 0x4, offset = 0x4, fixed_abs, tag = 'smem constant byte address 0x4 - core index']
  #allocation1 [shape = 'u32[144,128]{1,0:T(1,128)}', space=vmem, size = 0x12000, scoped, tag = 'internal scratch']
  #allocation2 [shape = 'f32[8,128]{1,0:T(8,128)}', space=vmem, size = 0x1000, scoped, tag = 'scratch operand']
  #allocation3 [shape = 'f32[8,128]{1,0:T(8,128)}', space=vmem, size = 0x1000, scoped, tag = 'scratch operand']
  %s0 = inlined_call_operand.vmem [shape: f32[2,128], index: 0, kind: input, shape index: {}]
  %s1 = inlined_call_operand.vmem [shape: f32[2,128], index: 1, kind: input, shape index: {}]
  %s2 = inlined_call_operand.hbm [shape: f32[1,2], index: 2, kind: output, shape index: {}]
  %s3 = sld [smem:[#allocation0]]
  $region26: #{_masked_loss_sums.1} parent=0
    _
  %s5 = ssub.s32 1, %s3
  %s6 = scalar_select 0, %s5, %s3
  $region1: #{_masked_loss_sums.1} parent=0
    #allocation4 [shape = 'u8[512]{0}', space=smem, size = 0x200, scoped, tag = 'output window, operand 0, single buffered']
    #allocation5 [shape = 's32[1]{0}', space=sflag, size = 0x4, scoped, tag = 'scoped memory for _masked_loss_sums.1']
    %7 = vsyncpa [#allocation5], 0
    // Predicated region
    $region2: #{_masked_loss_sums.1} parent=1 // pred_check
      _
    $region3: #{_masked_loss_sums.1} parent=1 // pred_check_branch
      %9 = sbr.rel (0) target = $region5
    $region4: #{_masked_loss_sums.1} parent=1 // pred_region
      %s10 = sadd.s32 0, 0
      %p11 = scmp.lt.s32.totalorder %s10, 0
      %s12 = scalar_select %p11, %s10, 0
      %s13 = smul.u32 16, %s12
      %s14 = ssub.s32 1, %s13
      %s15 = smul.u32 32, %s14
      %p16 = scmp.lt.s32.totalorder %s13, 0
      %s17 = scalar_select %p16, %s13, 0
      %s18 = smul.addr %s17, 2
      %s19 = scalar_lea.vmem %s0, %s18
      %s20 = sadd.s32 0, 0
      %p21 = scmp.lt.s32.totalorder %s20, 0
      %s22 = scalar_select %p21, %s20, 0
      %s23 = smul.u32 16, %s22
      %s24 = ssub.s32 1, %s23
      %s25 = smul.u32 32, %s24
    $region5: #{_masked_loss_sums.1} parent=1 // pred_fallthru
      _
    // Predicated region
    $region6: #{_masked_loss_sums.1} parent=1 // pred_check
      _
    $region7: #{_masked_loss_sums.1} parent=1 // pred_check_branch
      %27 = sbr.rel (0) target = $region9
    $region8: #{_masked_loss_sums.1} parent=1 // pred_region
      %s28 = sadd.s32 0, 0
      %p29 = scmp.lt.s32.totalorder %s28, 0
      %s30 = scalar_select %p29, %s28, 0
      %s31 = smul.u32 16, %s30
      %s32 = ssub.s32 1, %s31
      %s33 = smul.u32 32, %s32
      %p34 = scmp.lt.s32.totalorder %s31, 0
      %s35 = scalar_select %p34, %s31, 0
      %s36 = smul.addr %s35, 2
      %s37 = scalar_lea.vmem %s1, %s36
      %s38 = sadd.s32 0, 0
      %p39 = scmp.lt.s32.totalorder %s38, 0
      %s40 = scalar_select %p39, %s38, 0
      %s41 = smul.u32 16, %s40
      %s42 = ssub.s32 1, %s41
      %s43 = smul.u32 32, %s42
    $region9: #{_masked_loss_sums.1} parent=1 // pred_fallthru
      _
    %s44 = sadd.s32 0, 0
    %p45 = scmp.lt.s32.totalorder %s44, 0
    %s46 = scalar_select %p45, %s44, 0
    %s47 = smul.u32 16, %s46
    %s48 = ssub.s32 1, %s47
    %s49 = smul.u32 32, %s48
    %p50 = scmp.lt.s32.totalorder %s47, 0
    %s51 = scalar_select %p50, %s47, 0
    %s52 = smul.addr %s51, 2
    %s53 = scalar_lea.vmem %s0, %s52
    %s54 = sadd.s32 0, 0
    %p55 = scmp.lt.s32.totalorder %s54, 0
    %s56 = scalar_select %p55, %s54, 0
    %s57 = smul.u32 16, %s56
    %s58 = ssub.s32 1, %s57
    %s59 = smul.u32 32, %s58
    %p60 = scmp.lt.s32.totalorder %s57, 0
    %s61 = scalar_select %p60, %s57, 0
    %s62 = smul.addr %s61, 2
    %s63 = scalar_lea.vmem %s1, %s62
    %s64 = sadd.s32 0, 0
    %p65 = scmp.lt.s32.totalorder %s64, 0
    %s66 = scalar_select %p65, %s64, 0
    %s67 = smul.u32 16, %s66
    %s68 = ssub.s32 1, %s67
    %s69 = smul.u32 32, %s68
    %p70 = scmp.lt.s32.totalorder %s67, 0
    %s71 = scalar_select %p70, %s67, 0
    %s72 = smul.addr %s71, 2
    %s73 = scalar_lea.vmem %s0, %s72
    %s74 = sadd.s32 0, 0
    %p75 = scmp.lt.s32.totalorder %s74, 0
    %s76 = scalar_select %p75, %s74, 0
    %s77 = smul.u32 16, %s76
    %s78 = ssub.s32 1, %s77
    %s79 = smul.u32 32, %s78
    %s80 = sadd.s32 0, 0
    %p81 = scmp.lt.s32.totalorder %s80, 0
    %s82 = scalar_select %p81, %s80, 0
    %s83 = smul.u32 16, %s82
    %s84 = ssub.s32 1, %s83
    %s85 = smul.u32 32, %s84
    %p86 = scmp.lt.s32.totalorder %s83, 0
    %s87 = scalar_select %p86, %s83, 0
    %s88 = smul.addr %s87, 2
    %s89 = scalar_lea.vmem %s1, %s88
    %s90 = sadd.s32 0, 0
    %p91 = scmp.lt.s32.totalorder %s90, 0
    %s92 = scalar_select %p91, %s90, 0
    %s93 = smul.u32 16, %s92
    %s94 = ssub.s32 1, %s93
    %s95 = smul.u32 32, %s94
    %p96 = scmp.eq.s32.totalorder 0, 0
    // Predicated region
    $region10: #{_masked_loss_sums.1} parent=1 // pred_check
      %p97 = pneg %p96
    $region11: #{_masked_loss_sums.1} parent=1 // pred_check_branch
      %99 = sbr.rel (%p97) target = $region13
    $region12: #{_masked_loss_sums.1} parent=1 // pred_region
      %100 = vst [vmem:[#allocation2] sm:$0xff] 0.0
      %101 = vst [vmem:[#allocation3] sm:$0xff] 0.0
    $region13: #{_masked_loss_sums.1} parent=1 // pred_fallthru
      _
    %v102 = vld [vmem:[%s73] sm:$0xff]
    %v103 = vld [vmem:[%s73 + $0x8] sm:$0xff]
    %v104 = vld [vmem:[%s73 + $0x10] sm:$0xff]
    %v105 = vld [vmem:[%s73 + $0x18] sm:$0xff]
    %v106 = vld [vmem:[%s89] sm:$0xff]
    %v107 = vld [vmem:[%s89 + $0x8] sm:$0xff]
    %v108 = vld [vmem:[%s89 + $0x10] sm:$0xff]
    %v109 = vld [vmem:[%s89 + $0x18] sm:$0xff]
    %s110 = sadd.s32 0, 0
    %s111 = smul.u32 %s110, 32
    %v112 = vlaneseq
    %v113 = vshrl.u32 %v112, 7
    %v114 = vadd.s32 %v113, 8
    %v115 = vadd.s32 %v113, 16
    %v116 = vadd.s32 %v113, 24
    %v117 = vstv %s111
    %v118 = vadd.s32 %v117, %v113
    %v119 = vadd.s32 %v117, %v114
    %v120 = vadd.s32 %v117, %v115
    %v121 = vadd.s32 %v117, %v116
    %vm122 = vcmp.lt.s32.totalorder %v118, 2
    %vm123 = vcmp.lt.s32.totalorder %v119, 2
    %vm124 = vcmp.lt.s32.totalorder %v120, 2
    %vm125 = vcmp.lt.s32.totalorder %v121, 2
    %vm126 = vcmp.ge.f32.partialorder %v106, 0.0
    %vm127 = vcmp.ge.f32.partialorder %v107, 0.0
    %vm128 = vcmp.ge.f32.partialorder %v108, 0.0
    %vm129 = vcmp.ge.f32.partialorder %v109, 0.0
    %vm130 = vmand %vm122, %vm126
    %vm131 = vmand %vm123, %vm127
    %vm132 = vmand %vm124, %vm128
    %vm133 = vmand %vm125, %vm129
    %v134 = vmax.f32 %v102, 0.0
    %v135 = vmax.f32 %v103, 0.0
    %v136 = vmax.f32 %v104, 0.0
    %v137 = vmax.f32 %v105, 0.0
    %v138 = vmul.f32 %v102, %v106
    %v139 = vmul.f32 %v103, %v107
    %v140 = vmul.f32 %v104, %v108
    %v141 = vmul.f32 %v105, %v109
    %v142 = vsub.f32 %v134, %v138
    %v143 = vsub.f32 %v135, %v139
    %v144 = vsub.f32 %v136, %v140
    %v145 = vsub.f32 %v137, %v141
    %v146 = vand.u32 2147483647, %v102
    %v147 = vand.u32 2147483647, %v103
    %v148 = vand.u32 2147483647, %v104
    %v149 = vand.u32 2147483647, %v105
    %v150 = vsub.f32 0.0, %v146
    %v151 = vsub.f32 0.0, %v147
    %v152 = vsub.f32 0.0, %v148
    %v153 = vsub.f32 0.0, %v149
    %v154 = vmul.f32 %v150, 1.442695
    %v155 = vpow.pop %v154
    %v156 = vmul.f32 %v151, 1.442695
    %v157 = vpow.pop %v156
    %v158 = vmul.f32 %v152, 1.442695
    %v159 = vpow.pop %v158
    %v160 = vmul.f32 %v153, 1.442695
    %v161 = vpow.pop %v160
    %v162 = vadd.f32 %v155, 1.0
    %v163 = vlog2.pop %v162
    %v164 = vmul.f32 %v163, 0.6931472
    %v165 = vmul.f32 -0.5, %v155
    %v166 = vadd.f32 %v165, 1.0
    %v167 = vmul.f32 %v166, %v155
    %v168 = vand.u32 2147483647, %v155
    %vm169 = vcmp.lt.f32.partialorder %v168, 0.0004427343
    %v170 = vsel %vm169, %v167, %v164
    %v171 = vadd.f32 %v157, 1.0
    %v172 = vlog2.pop %v171
    %v173 = vmul.f32 %v172, 0.6931472
    %v174 = vmul.f32 -0.5, %v157
    %v175 = vadd.f32 %v174, 1.0
    %v176 = vmul.f32 %v175, %v157
    %v177 = vand.u32 2147483647, %v157
    %vm178 = vcmp.lt.f32.partialorder %v177, 0.0004427343
    %v179 = vsel %vm178, %v176, %v173
    %v180 = vadd.f32 %v159, 1.0
    %v181 = vlog2.pop %v180
    %v182 = vmul.f32 %v181, 0.6931472
    %v183 = vmul.f32 -0.5, %v159
    %v184 = vadd.f32 %v183, 1.0
    %v185 = vmul.f32 %v184, %v159
    %v186 = vand.u32 2147483647, %v159
    %vm187 = vcmp.lt.f32.partialorder %v186, 0.0004427343
    %v188 = vsel %vm187, %v185, %v182
    %v189 = vadd.f32 %v161, 1.0
    %v190 = vlog2.pop %v189
    %v191 = vmul.f32 %v190, 0.6931472
    %v192 = vmul.f32 -0.5, %v161
    %v193 = vadd.f32 %v192, 1.0
    %v194 = vmul.f32 %v193, %v161
    %v195 = vand.u32 2147483647, %v161
    %vm196 = vcmp.lt.f32.partialorder %v195, 0.0004427343
    %v197 = vsel %vm196, %v194, %v191
    %v198 = vadd.f32 %v142, %v170
    %v199 = vadd.f32 %v143, %v179
    %v200 = vadd.f32 %v144, %v188
    %v201 = vadd.f32 %v145, %v197
    %v202 = vsel %vm130, %v198, 0.0
    %v203 = vsel %vm131, %v199, 0.0
    %v204 = vsel %vm132, %v200, 0.0
    %v205 = vsel %vm133, %v201, 0.0
    %v206 = vsel %vm130, 1.0, 0.0
    %v207 = vsel %vm131, 1.0, 0.0
    %v208 = vsel %vm132, 1.0, 0.0
    %v209 = vsel %vm133, 1.0, 0.0
    %v210 = vld [vmem:[#allocation2] sm:$0xff]
    %v211 = vadd.f32 %v202, %v203
    %v212 = vadd.f32 %v211, %v204
    %v213 = vadd.f32 %v212, %v205
    %v214 = vadd.f32 %v210, %v213
    %215 = vst [vmem:[#allocation2] sm:$0xff] %v214
    %v216 = vld [vmem:[#allocation3] sm:$0xff]
    %v217 = vadd.f32 %v206, %v207
    %v218 = vadd.f32 %v217, %v208
    %v219 = vadd.f32 %v218, %v209
    %v220 = vadd.f32 %v216, %v219
    %221 = vst [vmem:[#allocation3] sm:$0xff] %v220
    // Predicated region
    $region14: #{_masked_loss_sums.1} parent=1 // pred_check
      %p222 = pneg %p96
    $region15: #{_masked_loss_sums.1} parent=1 // pred_check_branch
      %224 = sbr.rel (%p222) target = $region17
    $region16: #{_masked_loss_sums.1} parent=1 // pred_region
      %v225 = vld [vmem:[#allocation2] sm:$0xff]
      %226 = vadd.xlane.f32.xlu0 %v225
      %v227 = vpop.xlane.xlu0 %226
      %v228 = vrot.slane %v227, 4
      %v229 = vadd.f32 %v227, %v228
      %v230 = vrot.slane %v229, 2
      %v231 = vadd.f32 %v229, %v230
      %v232 = vrot.slane %v231, 1
      %v233 = vadd.f32 %v231, %v232
      %s234 = vtos %v233
      %s235 = scalar_lea.smem [#allocation4], 0
      %236 = sst [smem:[%s235]] %s234
      %v237 = vld [vmem:[#allocation3] sm:$0xff]
      %238 = vadd.xlane.f32.xlu0 %v237
      %v239 = vpop.xlane.xlu0 %238
      %v240 = vrot.slane %v239, 4
      %v241 = vadd.f32 %v239, %v240
      %v242 = vrot.slane %v241, 2
      %v243 = vadd.f32 %v241, %v242
      %v244 = vrot.slane %v243, 1
      %v245 = vadd.f32 %v243, %v244
      %s246 = vtos %v245
      %s247 = scalar_lea.smem [#allocation4], 1
      %248 = sst [smem:[%s247]] %s246
    $region17: #{_masked_loss_sums.1} parent=1 // pred_fallthru
      _
    // Predicated region
    $region18: #{_masked_loss_sums.1} parent=1 // pred_check
      _
    $region19: #{_masked_loss_sums.1} parent=1 // pred_check_branch
      %250 = sbr.rel (0) target = $region21
    $region20: #{_masked_loss_sums.1} parent=1 // pred_region
      %s252 = ssub.s32 16, 16
      %253 = vsyncadd [#allocation5], %s252
      %256 = dma.smem_to_hbm [#allocation4], 16, %s2, [#allocation5]
    $region21: #{_masked_loss_sums.1} parent=1 // pred_fallthru
      _
    // Predicated region
    $region22: #{_masked_loss_sums.1} parent=1 // pred_check
      _
    $region23: #{_masked_loss_sums.1} parent=1 // pred_check_branch
      %258 = sbr.rel (0) target = $region25
    $region24: #{_masked_loss_sums.1} parent=1 // pred_region
      %259 = dma.done [#allocation5], 16
    $region25: #{_masked_loss_sums.1} parent=1 // pred_fallthru
      _
    %260 = sfence
    %261 = vsyncpa [#allocation5], 1

</llo_original>
